<compile_context>
chip_gen: v6e
topology: v6e:2x2x1
jax: 0.10.0
libtpu: 0.0.40
codegen_flags: <defaults>
</compile_context>

<pallas_src>
import functools

import jax
import jax.numpy as jnp
from jax.experimental import pallas as pl
from jax.experimental.pallas import tpu as pltpu

N_AGENTS = 128
N_TIMESTEPS = 8
N_REPLICAS = 8          # independent Monte-Carlo replicas packed on the sublane axis
DELTA_T = 1.0

# Threshold no neighbor count (<= N_AGENTS) can ever reach: used for degree-0
# nodes so they are never infected (matches the effectively-zero clipped prob).
_UNREACHABLE = 1e30


def sir_kernel(adj_ref, init_ref, thr_ref, rmask_ref, out_ref, *, n_timesteps):
    """Unrolled SIR time loop: one bf16 MXU matmul + a few VPU ops per step.

    adj_ref   : (N, N)  bf16   adjacency, adj[src, tgt] = 1 per directed edge
    init_ref  : (B, N)  f32    initial infected indicator (0/1)
    thr_ref   : (T, B, N) f32  infection threshold on the neighbor count
    rmask_ref : (T, B, N) f32  recovery 0/1 mask (gamma >= u)
    out_ref   : (2T+1, B, N) f32  row 0 = initial infected; rows 1+2t / 2+2t =
                                  new infections / new recoveries at step t
    """
    # Load once; the identical operand feeds every matmul in the unrolled loop
    # so the MXU weight push can stay resident across steps.
    adj = adj_ref[...]                                   # (N, N) bf16

    inf = init_ref[...]                                  # (B, N) f32, 0/1
    sus = 1.0 - inf
    out_ref[0] = inf                                     # day-0 infected row

    for t in range(n_timesteps):
        # message passing: n_infected_neighbors_i = sum_{j->i} infected_j
        neigh = jnp.dot(inf.astype(jnp.bfloat16), adj,
                        preferred_element_type=jnp.float32)      # (B, N) f32
        # infection draw (all algebra pre-folded into thr): fires only if sus==1
        new_inf = jnp.where(neigh >= thr_ref[t], sus, 0.0)
        # recovery draw: inf * (gamma >= u), mask precomputed in the wrapper
        new_rec = inf * rmask_ref[t]

        # lane-dense full-tile stores; reduced later in the wrapper
        out_ref[1 + 2 * t] = new_inf
        out_ref[2 + 2 * t] = new_rec

        inf = inf + new_inf - new_rec
        sus = sus - new_inf


def sir_forward(params, adj, gumbel, *, n_timesteps=N_TIMESTEPS,
                n_agents=N_AGENTS, delta_t=DELTA_T):
    """Vectorized SIR forward over B independent Monte-Carlo replicas.

    params: (3,) = (beta, gamma, initial_fraction_infected)
    adj:    (N, N) dense 0/1 adjacency, adj[src, tgt] = 1 per directed edge
    gumbel: (B, 1 + 2*T, 2, N) Gumbel noise, one (2, N) draw per Bernoulli-GS
            sample (init, then infection & recovery per step)

    Returns (susceptible_per_day, infected_per_day, recovered_per_day), each of
    shape (B, n_timesteps + 1); a single replica matches SIR.forward().
    """
    beta, gamma, init_frac = params[0], params[1], params[2]
    n_rep = gumbel.shape[0]

    # ---- hoisted Gumbel-Softmax / probability algebra (plain XLA) ----
    # hard-GS argmax: argmax(log p + g0, log(1-p) + g1) == 0  <=>  p >= sigmoid(g1-g0)
    u = jax.nn.sigmoid(gumbel[:, :, 1, :] - gumbel[:, :, 0, :])      # (B, 1+2T, N)
    u0 = u[:, 0, :]                                                  # (B, N)
    u_inf = jnp.transpose(u[:, 1::2, :], (1, 0, 2))                  # (T, B, N)
    u_rec = jnp.transpose(u[:, 2::2, :], (1, 0, 2))                  # (T, B, N)

    init_inf = (init_frac >= u0).astype(jnp.float32)                 # (B, N)

    # infection: 1-exp(-beta*dt*neigh/deg) >= u  <=>  neigh >= -log1p(-u)*deg/(beta*dt)
    deg = jnp.sum(adj, axis=0)                                       # (N,) in-degree
    inf_thr = jnp.where(deg > 0,
                        (-jnp.log1p(-u_inf)) * deg / (beta * delta_t),
                        _UNREACHABLE).astype(jnp.float32)            # (T, B, N)
    # recovery: clip(gamma*inf, 1e-10, 1) >= u   (inf is 0/1  =>  inf * (gamma >= u))
    rec_mask = (gamma >= u_rec).astype(jnp.float32)                  # (T, B, N)

    # 0/1 adjacency in bf16 is exact; accumulation stays f32 in the MXU.
    adj_bf16 = adj.astype(jnp.bfloat16)

    kernel = functools.partial(sir_kernel, n_timesteps=n_timesteps)
    out = pl.pallas_call(
        kernel,
        out_shape=jax.ShapeDtypeStruct((2 * n_timesteps + 1, n_rep, n_agents),
                                       jnp.float32),
        in_specs=[
            pl.BlockSpec(memory_space=pltpu.MemorySpace.VMEM),   # adj   (N, N) bf16
            pl.BlockSpec(memory_space=pltpu.MemorySpace.VMEM),   # init  (B, N) f32
            pl.BlockSpec(memory_space=pltpu.MemorySpace.VMEM),   # thr   (T, B, N) f32
            pl.BlockSpec(memory_space=pltpu.MemorySpace.VMEM),   # rmask (T, B, N) f32
        ],
        out_specs=pl.BlockSpec(memory_space=pltpu.MemorySpace.VMEM),
    )(adj_bf16, init_inf, inf_thr, rec_mask)

    # ---- observe(): cumulative per-day fractions (tiny, done in XLA) ----
    inf0 = jnp.sum(out[0], axis=-1)                                  # (B,)
    d_inf = jnp.sum(out[1::2], axis=-1)                              # (T, B)
    d_rec = jnp.sum(out[2::2], axis=-1)                              # (T, B)

    inf_pd = jnp.concatenate(
        [inf0[None, :], inf0[None, :] + jnp.cumsum(d_inf - d_rec, axis=0)], axis=0)
    rec_pd = jnp.concatenate(
        [jnp.zeros((1, n_rep), jnp.float32), jnp.cumsum(d_rec, axis=0)], axis=0)
    sus_pd = n_agents - inf_pd - rec_pd

    inv_n = 1.0 / n_agents
    return sus_pd.T * inv_n, inf_pd.T * inv_n, rec_pd.T * inv_n      # each (B, T+1)


if __name__ == "__main__":
    key = jax.random.PRNGKey(0)

    # Deterministic undirected ring-lattice graph: node i <-> i±1, i±2 (degree 4,
    # no isolated nodes). adj[src, tgt] = 1.0 per directed edge.
    idx = jnp.arange(N_AGENTS)
    adj = jnp.zeros((N_AGENTS, N_AGENTS), jnp.float32)
    for d in (1, 2):
        adj = adj.at[idx, (idx + d) % N_AGENTS].set(1.0)
        adj = adj.at[idx, (idx - d) % N_AGENTS].set(1.0)

    # params = (beta, gamma, initial_fraction_infected)
    params = jnp.array([0.3, 0.1, 0.2], dtype=jnp.float32)

    # Gumbel noise: per replica, 1 init draw + 2 draws per step, 2 categories/agent
    # (same parameterization as the torch Gumbel-Softmax spec).
    gumbel = jax.random.gumbel(
        key, (N_REPLICAS, 1 + 2 * N_TIMESTEPS, 2, N_AGENTS), jnp.float32)

    fwd = jax.jit(functools.partial(sir_forward, n_timesteps=N_TIMESTEPS,
                                    n_agents=N_AGENTS, delta_t=DELTA_T))
    sus_pd, inf_pd, rec_pd = jax.block_until_ready(fwd(params, adj, gumbel))

    # sanity: shapes, compartments conserve population, monotone recovered
    assert sus_pd.shape == (N_REPLICAS, N_TIMESTEPS + 1)
    total = sus_pd + inf_pd + rec_pd
    assert jnp.allclose(total, 1.0, atol=1e-5), total
    assert bool(jnp.all(inf_pd >= -1e-6)) and bool(jnp.all(rec_pd >= -1e-6))
    assert bool(jnp.all(jnp.diff(rec_pd, axis=1) >= -1e-6))

    # TODO(synk): straight-through gradient of hard Gumbel-Softmax not implemented (forward only).
    print("KERNEL_OK")
</pallas_src>

<mosaic_0001>
module attributes {stable_mosaic.version = 11 : i64} {
  func.func @sir_kernel(%arg0: memref<128x128xbf16, #tpu.memory_space<vmem>>, %arg1: memref<8x128xf32, #tpu.memory_space<vmem>>, %arg2: memref<8x8x128xf32, #tpu.memory_space<vmem>>, %arg3: memref<8x8x128xf32, #tpu.memory_space<vmem>>, %arg4: memref<17x8x128xf32, #tpu.memory_space<vmem>>) attributes {dimension_semantics = [], scalar_prefetch = 0 : i64, scratch_operands = 0 : i64, tpu.core_type = #tpu.core_type<tc>} {
    %c0 = arith.constant 0 : index
    %c0_0 = arith.constant 0 : index
    %0 = vector.load %arg0[%c0, %c0_0] : memref<128x128xbf16, #tpu.memory_space<vmem>>, vector<128x128xbf16>
    %c0_1 = arith.constant 0 : index
    %c0_2 = arith.constant 0 : index
    %1 = vector.load %arg1[%c0_1, %c0_2] : memref<8x128xf32, #tpu.memory_space<vmem>>, vector<8x128xf32>
    %cst = arith.constant 1.000000e+00 : f32
    %2 = vector.broadcast %cst : f32 to vector<8x128xf32>
    %3 = arith.subf %2, %1 : vector<8x128xf32>
    %c0_3 = arith.constant 0 : index
    %c0_4 = arith.constant 0 : index
    %c0_5 = arith.constant 0 : index
    %4 = vector.load %arg4[%c0_3, %c0_4, %c0_5] : memref<17x8x128xf32, #tpu.memory_space<vmem>>, vector<1x8x128xf32>
    %5 = vector.shape_cast %4 : vector<1x8x128xf32> to vector<8x128xf32>
    %6 = vector.shape_cast %1 : vector<8x128xf32> to vector<1x8x128xf32>
    tpu.vector_store %arg4[%c0_3, %c0_4, %c0_5], %6 {strides = array<i32>} : memref<17x8x128xf32, #tpu.memory_space<vmem>>, vector<1x8x128xf32>,
    %7 = arith.truncf %1 : vector<8x128xf32> to vector<8x128xbf16>
    %cst_6 = arith.constant dense<0.000000e+00> : vector<8x128xf32>
    %8 = tpu.matmul %7, %0, %cst_6 {dimension_numbers = #tpu.dot_dimension_numbers<[1], [0], [0], [1], [0, 0, 1, 1], [], []>} : vector<8x128xbf16>, vector<128x128xbf16>, vector<8x128xf32> -> vector<8x128xf32>
    %c0_7 = arith.constant 0 : index
    %c0_8 = arith.constant 0 : index
    %c0_9 = arith.constant 0 : index
    %9 = vector.load %arg2[%c0_7, %c0_8, %c0_9] : memref<8x8x128xf32, #tpu.memory_space<vmem>>, vector<1x8x128xf32>
    %10 = vector.shape_cast %9 : vector<1x8x128xf32> to vector<8x128xf32>
    %11 = arith.cmpf oge, %8, %10 : vector<8x128xf32>
    %cst_10 = arith.constant 0.000000e+00 : f32
    %12 = vector.broadcast %cst_10 : f32 to vector<8x128xf32>
    %13 = arith.select %11, %3, %12 : vector<8x128xi1>, vector<8x128xf32>
    %c0_11 = arith.constant 0 : index
    %c0_12 = arith.constant 0 : index
    %c0_13 = arith.constant 0 : index
    %14 = vector.load %arg3[%c0_11, %c0_12, %c0_13] : memref<8x8x128xf32, #tpu.memory_space<vmem>>, vector<1x8x128xf32>
    %15 = vector.shape_cast %14 : vector<1x8x128xf32> to vector<8x128xf32>
    %16 = arith.mulf %1, %15 : vector<8x128xf32>
    %c1 = arith.constant 1 : index
    %c0_14 = arith.constant 0 : index
    %c0_15 = arith.constant 0 : index
    %17 = vector.load %arg4[%c1, %c0_14, %c0_15] : memref<17x8x128xf32, #tpu.memory_space<vmem>>, vector<1x8x128xf32>
    %18 = vector.shape_cast %17 : vector<1x8x128xf32> to vector<8x128xf32>
    %19 = vector.shape_cast %13 : vector<8x128xf32> to vector<1x8x128xf32>
    tpu.vector_store %arg4[%c1, %c0_14, %c0_15], %19 {strides = array<i32>} : memref<17x8x128xf32, #tpu.memory_space<vmem>>, vector<1x8x128xf32>,
    %c2 = arith.constant 2 : index
    %c0_16 = arith.constant 0 : index
    %c0_17 = arith.constant 0 : index
    %20 = vector.load %arg4[%c2, %c0_16, %c0_17] : memref<17x8x128xf32, #tpu.memory_space<vmem>>, vector<1x8x128xf32>
    %21 = vector.shape_cast %20 : vector<1x8x128xf32> to vector<8x128xf32>
    %22 = vector.shape_cast %16 : vector<8x128xf32> to vector<1x8x128xf32>
    tpu.vector_store %arg4[%c2, %c0_16, %c0_17], %22 {strides = array<i32>} : memref<17x8x128xf32, #tpu.memory_space<vmem>>, vector<1x8x128xf32>,
    %23 = arith.addf %1, %13 : vector<8x128xf32>
    %24 = arith.subf %23, %16 : vector<8x128xf32>
    %25 = arith.subf %3, %13 : vector<8x128xf32>
    %26 = arith.truncf %24 : vector<8x128xf32> to vector<8x128xbf16>
    %cst_18 = arith.constant dense<0.000000e+00> : vector<8x128xf32>
    %27 = tpu.matmul %26, %0, %cst_18 {dimension_numbers = #tpu.dot_dimension_numbers<[1], [0], [0], [1], [0, 0, 1, 1], [], []>} : vector<8x128xbf16>, vector<128x128xbf16>, vector<8x128xf32> -> vector<8x128xf32>
    %c1_19 = arith.constant 1 : index
    %c0_20 = arith.constant 0 : index
    %c0_21 = arith.constant 0 : index
    %28 = vector.load %arg2[%c1_19, %c0_20, %c0_21] : memref<8x8x128xf32, #tpu.memory_space<vmem>>, vector<1x8x128xf32>
    %29 = vector.shape_cast %28 : vector<1x8x128xf32> to vector<8x128xf32>
    %30 = arith.cmpf oge, %27, %29 : vector<8x128xf32>
    %cst_22 = arith.constant 0.000000e+00 : f32
    %31 = vector.broadcast %cst_22 : f32 to vector<8x128xf32>
    %32 = arith.select %30, %25, %31 : vector<8x128xi1>, vector<8x128xf32>
    %c1_23 = arith.constant 1 : index
    %c0_24 = arith.constant 0 : index
    %c0_25 = arith.constant 0 : index
    %33 = vector.load %arg3[%c1_23, %c0_24, %c0_25] : memref<8x8x128xf32, #tpu.memory_space<vmem>>, vector<1x8x128xf32>
    %34 = vector.shape_cast %33 : vector<1x8x128xf32> to vector<8x128xf32>
    %35 = arith.mulf %24, %34 : vector<8x128xf32>
    %c3 = arith.constant 3 : index
    %c0_26 = arith.constant 0 : index
    %c0_27 = arith.constant 0 : index
    %36 = vector.load %arg4[%c3, %c0_26, %c0_27] : memref<17x8x128xf32, #tpu.memory_space<vmem>>, vector<1x8x128xf32>
    %37 = vector.shape_cast %36 : vector<1x8x128xf32> to vector<8x128xf32>
    %38 = vector.shape_cast %32 : vector<8x128xf32> to vector<1x8x128xf32>
    tpu.vector_store %arg4[%c3, %c0_26, %c0_27], %38 {strides = array<i32>} : memref<17x8x128xf32, #tpu.memory_space<vmem>>, vector<1x8x128xf32>,
    %c4 = arith.constant 4 : index
    %c0_28 = arith.constant 0 : index
    %c0_29 = arith.constant 0 : index
    %39 = vector.load %arg4[%c4, %c0_28, %c0_29] : memref<17x8x128xf32, #tpu.memory_space<vmem>>, vector<1x8x128xf32>
    %40 = vector.shape_cast %39 : vector<1x8x128xf32> to vector<8x128xf32>
    %41 = vector.shape_cast %35 : vector<8x128xf32> to vector<1x8x128xf32>
    tpu.vector_store %arg4[%c4, %c0_28, %c0_29], %41 {strides = array<i32>} : memref<17x8x128xf32, #tpu.memory_space<vmem>>, vector<1x8x128xf32>,
    %42 = arith.addf %24, %32 : vector<8x128xf32>
    %43 = arith.subf %42, %35 : vector<8x128xf32>
    %44 = arith.subf %25, %32 : vector<8x128xf32>
    %45 = arith.truncf %43 : vector<8x128xf32> to vector<8x128xbf16>
    %cst_30 = arith.constant dense<0.000000e+00> : vector<8x128xf32>
    %46 = tpu.matmul %45, %0, %cst_30 {dimension_numbers = #tpu.dot_dimension_numbers<[1], [0], [0], [1], [0, 0, 1, 1], [], []>} : vector<8x128xbf16>, vector<128x128xbf16>, vector<8x128xf32> -> vector<8x128xf32>
    %c2_31 = arith.constant 2 : index
    %c0_32 = arith.constant 0 : index
    %c0_33 = arith.constant 0 : index
    %47 = vector.load %arg2[%c2_31, %c0_32, %c0_33] : memref<8x8x128xf32, #tpu.memory_space<vmem>>, vector<1x8x128xf32>
    %48 = vector.shape_cast %47 : vector<1x8x128xf32> to vector<8x128xf32>
    %49 = arith.cmpf oge, %46, %48 : vector<8x128xf32>
    %cst_34 = arith.constant 0.000000e+00 : f32
    %50 = vector.broadcast %cst_34 : f32 to vector<8x128xf32>
    %51 = arith.select %49, %44, %50 : vector<8x128xi1>, vector<8x128xf32>
    %c2_35 = arith.constant 2 : index
    %c0_36 = arith.constant 0 : index
    %c0_37 = arith.constant 0 : index
    %52 = vector.load %arg3[%c2_35, %c0_36, %c0_37] : memref<8x8x128xf32, #tpu.memory_space<vmem>>, vector<1x8x128xf32>
    %53 = vector.shape_cast %52 : vector<1x8x128xf32> to vector<8x128xf32>
    %54 = arith.mulf %43, %53 : vector<8x128xf32>
    %c5 = arith.constant 5 : index
    %c0_38 = arith.constant 0 : index
    %c0_39 = arith.constant 0 : index
    %55 = vector.load %arg4[%c5, %c0_38, %c0_39] : memref<17x8x128xf32, #tpu.memory_space<vmem>>, vector<1x8x128xf32>
    %56 = vector.shape_cast %55 : vector<1x8x128xf32> to vector<8x128xf32>
    %57 = vector.shape_cast %51 : vector<8x128xf32> to vector<1x8x128xf32>
    tpu.vector_store %arg4[%c5, %c0_38, %c0_39], %57 {strides = array<i32>} : memref<17x8x128xf32, #tpu.memory_space<vmem>>, vector<1x8x128xf32>,
    %c6 = arith.constant 6 : index
    %c0_40 = arith.constant 0 : index
    %c0_41 = arith.constant 0 : index
    %58 = vector.load %arg4[%c6, %c0_40, %c0_41] : memref<17x8x128xf32, #tpu.memory_space<vmem>>, vector<1x8x128xf32>
    %59 = vector.shape_cast %58 : vector<1x8x128xf32> to vector<8x128xf32>
    %60 = vector.shape_cast %54 : vector<8x128xf32> to vector<1x8x128xf32>
    tpu.vector_store %arg4[%c6, %c0_40, %c0_41], %60 {strides = array<i32>} : memref<17x8x128xf32, #tpu.memory_space<vmem>>, vector<1x8x128xf32>,
    %61 = arith.addf %43, %51 : vector<8x128xf32>
    %62 = arith.subf %61, %54 : vector<8x128xf32>
    %63 = arith.subf %44, %51 : vector<8x128xf32>
    %64 = arith.truncf %62 : vector<8x128xf32> to vector<8x128xbf16>
    %cst_42 = arith.constant dense<0.000000e+00> : vector<8x128xf32>
    %65 = tpu.matmul %64, %0, %cst_42 {dimension_numbers = #tpu.dot_dimension_numbers<[1], [0], [0], [1], [0, 0, 1, 1], [], []>} : vector<8x128xbf16>, vector<128x128xbf16>, vector<8x128xf32> -> vector<8x128xf32>
    %c3_43 = arith.constant 3 : index
    %c0_44 = arith.constant 0 : index
    %c0_45 = arith.constant 0 : index
    %66 = vector.load %arg2[%c3_43, %c0_44, %c0_45] : memref<8x8x128xf32, #tpu.memory_space<vmem>>, vector<1x8x128xf32>
    %67 = vector.shape_cast %66 : vector<1x8x128xf32> to vector<8x128xf32>
    %68 = arith.cmpf oge, %65, %67 : vector<8x128xf32>
    %cst_46 = arith.constant 0.000000e+00 : f32
    %69 = vector.broadcast %cst_46 : f32 to vector<8x128xf32>
    %70 = arith.select %68, %63, %69 : vector<8x128xi1>, vector<8x128xf32>
    %c3_47 = arith.constant 3 : index
    %c0_48 = arith.constant 0 : index
    %c0_49 = arith.constant 0 : index
    %71 = vector.load %arg3[%c3_47, %c0_48, %c0_49] : memref<8x8x128xf32, #tpu.memory_space<vmem>>, vector<1x8x128xf32>
    %72 = vector.shape_cast %71 : vector<1x8x128xf32> to vector<8x128xf32>
    %73 = arith.mulf %62, %72 : vector<8x128xf32>
    %c7 = arith.constant 7 : index
    %c0_50 = arith.constant 0 : index
    %c0_51 = arith.constant 0 : index
    %74 = vector.load %arg4[%c7, %c0_50, %c0_51] : memref<17x8x128xf32, #tpu.memory_space<vmem>>, vector<1x8x128xf32>
    %75 = vector.shape_cast %74 : vector<1x8x128xf32> to vector<8x128xf32>
    %76 = vector.shape_cast %70 : vector<8x128xf32> to vector<1x8x128xf32>
    tpu.vector_store %arg4[%c7, %c0_50, %c0_51], %76 {strides = array<i32>} : memref<17x8x128xf32, #tpu.memory_space<vmem>>, vector<1x8x128xf32>,
    %c8 = arith.constant 8 : index
    %c0_52 = arith.constant 0 : index
    %c0_53 = arith.constant 0 : index
    %77 = vector.load %arg4[%c8, %c0_52, %c0_53] : memref<17x8x128xf32, #tpu.memory_space<vmem>>, vector<1x8x128xf32>
    %78 = vector.shape_cast %77 : vector<1x8x128xf32> to vector<8x128xf32>
    %79 = vector.shape_cast %73 : vector<8x128xf32> to vector<1x8x128xf32>
    tpu.vector_store %arg4[%c8, %c0_52, %c0_53], %79 {strides = array<i32>} : memref<17x8x128xf32, #tpu.memory_space<vmem>>, vector<1x8x128xf32>,
    %80 = arith.addf %62, %70 : vector<8x128xf32>
    %81 = arith.subf %80, %73 : vector<8x128xf32>
    %82 = arith.subf %63, %70 : vector<8x128xf32>
    %83 = arith.truncf %81 : vector<8x128xf32> to vector<8x128xbf16>
    %cst_54 = arith.constant dense<0.000000e+00> : vector<8x128xf32>
    %84 = tpu.matmul %83, %0, %cst_54 {dimension_numbers = #tpu.dot_dimension_numbers<[1], [0], [0], [1], [0, 0, 1, 1], [], []>} : vector<8x128xbf16>, vector<128x128xbf16>, vector<8x128xf32> -> vector<8x128xf32>
    %c4_55 = arith.constant 4 : index
    %c0_56 = arith.constant 0 : index
    %c0_57 = arith.constant 0 : index
    %85 = vector.load %arg2[%c4_55, %c0_56, %c0_57] : memref<8x8x128xf32, #tpu.memory_space<vmem>>, vector<1x8x128xf32>
    %86 = vector.shape_cast %85 : vector<1x8x128xf32> to vector<8x128xf32>
    %87 = arith.cmpf oge, %84, %86 : vector<8x128xf32>
    %cst_58 = arith.constant 0.000000e+00 : f32
    %88 = vector.broadcast %cst_58 : f32 to vector<8x128xf32>
    %89 = arith.select %87, %82, %88 : vector<8x128xi1>, vector<8x128xf32>
    %c4_59 = arith.constant 4 : index
    %c0_60 = arith.constant 0 : index
    %c0_61 = arith.constant 0 : index
    %90 = vector.load %arg3[%c4_59, %c0_60, %c0_61] : memref<8x8x128xf32, #tpu.memory_space<vmem>>, vector<1x8x128xf32>
    %91 = vector.shape_cast %90 : vector<1x8x128xf32> to vector<8x128xf32>
    %92 = arith.mulf %81, %91 : vector<8x128xf32>
    %c9 = arith.constant 9 : index
    %c0_62 = arith.constant 0 : index
    %c0_63 = arith.constant 0 : index
    %93 = vector.load %arg4[%c9, %c0_62, %c0_63] : memref<17x8x128xf32, #tpu.memory_space<vmem>>, vector<1x8x128xf32>
    %94 = vector.shape_cast %93 : vector<1x8x128xf32> to vector<8x128xf32>
    %95 = vector.shape_cast %89 : vector<8x128xf32> to vector<1x8x128xf32>
    tpu.vector_store %arg4[%c9, %c0_62, %c0_63], %95 {strides = array<i32>} : memref<17x8x128xf32, #tpu.memory_space<vmem>>, vector<1x8x128xf32>,
    %c10 = arith.constant 10 : index
    %c0_64 = arith.constant 0 : index
    %c0_65 = arith.constant 0 : index
    %96 = vector.load %arg4[%c10, %c0_64, %c0_65] : memref<17x8x128xf32, #tpu.memory_space<vmem>>, vector<1x8x128xf32>
    %97 = vector.shape_cast %96 : vector<1x8x128xf32> to vector<8x128xf32>
    %98 = vector.shape_cast %92 : vector<8x128xf32> to vector<1x8x128xf32>
    tpu.vector_store %arg4[%c10, %c0_64, %c0_65], %98 {strides = array<i32>} : memref<17x8x128xf32, #tpu.memory_space<vmem>>, vector<1x8x128xf32>,
    %99 = arith.addf %81, %89 : vector<8x128xf32>
    %100 = arith.subf %99, %92 : vector<8x128xf32>
    %101 = arith.subf %82, %89 : vector<8x128xf32>
    %102 = arith.truncf %100 : vector<8x128xf32> to vector<8x128xbf16>
    %cst_66 = arith.constant dense<0.000000e+00> : vector<8x128xf32>
    %103 = tpu.matmul %102, %0, %cst_66 {dimension_numbers = #tpu.dot_dimension_numbers<[1], [0], [0], [1], [0, 0, 1, 1], [], []>} : vector<8x128xbf16>, vector<128x128xbf16>, vector<8x128xf32> -> vector<8x128xf32>
    %c5_67 = arith.constant 5 : index
    %c0_68 = arith.constant 0 : index
    %c0_69 = arith.constant 0 : index
    %104 = vector.load %arg2[%c5_67, %c0_68, %c0_69] : memref<8x8x128xf32, #tpu.memory_space<vmem>>, vector<1x8x128xf32>
    %105 = vector.shape_cast %104 : vector<1x8x128xf32> to vector<8x128xf32>
    %106 = arith.cmpf oge, %103, %105 : vector<8x128xf32>
    %cst_70 = arith.constant 0.000000e+00 : f32
    %107 = vector.broadcast %cst_70 : f32 to vector<8x128xf32>
    %108 = arith.select %106, %101, %107 : vector<8x128xi1>, vector<8x128xf32>
    %c5_71 = arith.constant 5 : index
    %c0_72 = arith.constant 0 : index
    %c0_73 = arith.constant 0 : index
    %109 = vector.load %arg3[%c5_71, %c0_72, %c0_73] : memref<8x8x128xf32, #tpu.memory_space<vmem>>, vector<1x8x128xf32>
    %110 = vector.shape_cast %109 : vector<1x8x128xf32> to vector<8x128xf32>
    %111 = arith.mulf %100, %110 : vector<8x128xf32>
    %c11 = arith.constant 11 : index
    %c0_74 = arith.constant 0 : index
    %c0_75 = arith.constant 0 : index
    %112 = vector.load %arg4[%c11, %c0_74, %c0_75] : memref<17x8x128xf32, #tpu.memory_space<vmem>>, vector<1x8x128xf32>
    %113 = vector.shape_cast %112 : vector<1x8x128xf32> to vector<8x128xf32>
    %114 = vector.shape_cast %108 : vector<8x128xf32> to vector<1x8x128xf32>
    tpu.vector_store %arg4[%c11, %c0_74, %c0_75], %114 {strides = array<i32>} : memref<17x8x128xf32, #tpu.memory_space<vmem>>, vector<1x8x128xf32>,
    %c12 = arith.constant 12 : index
    %c0_76 = arith.constant 0 : index
    %c0_77 = arith.constant 0 : index
    %115 = vector.load %arg4[%c12, %c0_76, %c0_77] : memref<17x8x128xf32, #tpu.memory_space<vmem>>, vector<1x8x128xf32>
    %116 = vector.shape_cast %115 : vector<1x8x128xf32> to vector<8x128xf32>
    %117 = vector.shape_cast %111 : vector<8x128xf32> to vector<1x8x128xf32>
    tpu.vector_store %arg4[%c12, %c0_76, %c0_77], %117 {strides = array<i32>} : memref<17x8x128xf32, #tpu.memory_space<vmem>>, vector<1x8x128xf32>,
    %118 = arith.addf %100, %108 : vector<8x128xf32>
    %119 = arith.subf %118, %111 : vector<8x128xf32>
    %120 = arith.subf %101, %108 : vector<8x128xf32>
    %121 = arith.truncf %119 : vector<8x128xf32> to vector<8x128xbf16>
    %cst_78 = arith.constant dense<0.000000e+00> : vector<8x128xf32>
    %122 = tpu.matmul %121, %0, %cst_78 {dimension_numbers = #tpu.dot_dimension_numbers<[1], [0], [0], [1], [0, 0, 1, 1], [], []>} : vector<8x128xbf16>, vector<128x128xbf16>, vector<8x128xf32> -> vector<8x128xf32>
    %c6_79 = arith.constant 6 : index
    %c0_80 = arith.constant 0 : index
    %c0_81 = arith.constant 0 : index
    %123 = vector.load %arg2[%c6_79, %c0_80, %c0_81] : memref<8x8x128xf32, #tpu.memory_space<vmem>>, vector<1x8x128xf32>
    %124 = vector.shape_cast %123 : vector<1x8x128xf32> to vector<8x128xf32>
    %125 = arith.cmpf oge, %122, %124 : vector<8x128xf32>
    %cst_82 = arith.constant 0.000000e+00 : f32
    %126 = vector.broadcast %cst_82 : f32 to vector<8x128xf32>
    %127 = arith.select %125, %120, %126 : vector<8x128xi1>, vector<8x128xf32>
    %c6_83 = arith.constant 6 : index
    %c0_84 = arith.constant 0 : index
    %c0_85 = arith.constant 0 : index
    %128 = vector.load %arg3[%c6_83, %c0_84, %c0_85] : memref<8x8x128xf32, #tpu.memory_space<vmem>>, vector<1x8x128xf32>
    %129 = vector.shape_cast %128 : vector<1x8x128xf32> to vector<8x128xf32>
    %130 = arith.mulf %119, %129 : vector<8x128xf32>
    %c13 = arith.constant 13 : index
    %c0_86 = arith.constant 0 : index
    %c0_87 = arith.constant 0 : index
    %131 = vector.load %arg4[%c13, %c0_86, %c0_87] : memref<17x8x128xf32, #tpu.memory_space<vmem>>, vector<1x8x128xf32>
    %132 = vector.shape_cast %131 : vector<1x8x128xf32> to vector<8x128xf32>
    %133 = vector.shape_cast %127 : vector<8x128xf32> to vector<1x8x128xf32>
    tpu.vector_store %arg4[%c13, %c0_86, %c0_87], %133 {strides = array<i32>} : memref<17x8x128xf32, #tpu.memory_space<vmem>>, vector<1x8x128xf32>,
    %c14 = arith.constant 14 : index
    %c0_88 = arith.constant 0 : index
    %c0_89 = arith.constant 0 : index
    %134 = vector.load %arg4[%c14, %c0_88, %c0_89] : memref<17x8x128xf32, #tpu.memory_space<vmem>>, vector<1x8x128xf32>
    %135 = vector.shape_cast %134 : vector<1x8x128xf32> to vector<8x128xf32>
    %136 = vector.shape_cast %130 : vector<8x128xf32> to vector<1x8x128xf32>
    tpu.vector_store %arg4[%c14, %c0_88, %c0_89], %136 {strides = array<i32>} : memref<17x8x128xf32, #tpu.memory_space<vmem>>, vector<1x8x128xf32>,
    %137 = arith.addf %119, %127 : vector<8x128xf32>
    %138 = arith.subf %137, %130 : vector<8x128xf32>
    %139 = arith.subf %120, %127 : vector<8x128xf32>
    %140 = arith.truncf %138 : vector<8x128xf32> to vector<8x128xbf16>
    %cst_90 = arith.constant dense<0.000000e+00> : vector<8x128xf32>
    %141 = tpu.matmul %140, %0, %cst_90 {dimension_numbers = #tpu.dot_dimension_numbers<[1], [0], [0], [1], [0, 0, 1, 1], [], []>} : vector<8x128xbf16>, vector<128x128xbf16>, vector<8x128xf32> -> vector<8x128xf32>
    %c7_91 = arith.constant 7 : index
    %c0_92 = arith.constant 0 : index
    %c0_93 = arith.constant 0 : index
    %142 = vector.load %arg2[%c7_91, %c0_92, %c0_93] : memref<8x8x128xf32, #tpu.memory_space<vmem>>, vector<1x8x128xf32>
    %143 = vector.shape_cast %142 : vector<1x8x128xf32> to vector<8x128xf32>
    %144 = arith.cmpf oge, %141, %143 : vector<8x128xf32>
    %cst_94 = arith.constant 0.000000e+00 : f32
    %145 = vector.broadcast %cst_94 : f32 to vector<8x128xf32>
    %146 = arith.select %144, %139, %145 : vector<8x128xi1>, vector<8x128xf32>
    %c7_95 = arith.constant 7 : index
    %c0_96 = arith.constant 0 : index
    %c0_97 = arith.constant 0 : index
    %147 = vector.load %arg3[%c7_95, %c0_96, %c0_97] : memref<8x8x128xf32, #tpu.memory_space<vmem>>, vector<1x8x128xf32>
    %148 = vector.shape_cast %147 : vector<1x8x128xf32> to vector<8x128xf32>
    %149 = arith.mulf %138, %148 : vector<8x128xf32>
    %c15 = arith.constant 15 : index
    %c0_98 = arith.constant 0 : index
    %c0_99 = arith.constant 0 : index
    %150 = vector.load %arg4[%c15, %c0_98, %c0_99] : memref<17x8x128xf32, #tpu.memory_space<vmem>>, vector<1x8x128xf32>
    %151 = vector.shape_cast %150 : vector<1x8x128xf32> to vector<8x128xf32>
    %152 = vector.shape_cast %146 : vector<8x128xf32> to vector<1x8x128xf32>
    tpu.vector_store %arg4[%c15, %c0_98, %c0_99], %152 {strides = array<i32>} : memref<17x8x128xf32, #tpu.memory_space<vmem>>, vector<1x8x128xf32>,
    %c16 = arith.constant 16 : index
    %c0_100 = arith.constant 0 : index
    %c0_101 = arith.constant 0 : index
    %153 = vector.load %arg4[%c16, %c0_100, %c0_101] : memref<17x8x128xf32, #tpu.memory_space<vmem>>, vector<1x8x128xf32>
    %154 = vector.shape_cast %153 : vector<1x8x128xf32> to vector<8x128xf32>
    %155 = vector.shape_cast %149 : vector<8x128xf32> to vector<1x8x128xf32>
    tpu.vector_store %arg4[%c16, %c0_100, %c0_101], %155 {strides = array<i32>} : memref<17x8x128xf32, #tpu.memory_space<vmem>>, vector<1x8x128xf32>,
    return
  }
}

</mosaic_0001>

<llo_original>
// kernel: sub.7
$region0: #{sub.7}
  #allocation0 [shape = 's32[1]{0}', space=sflag, size = 0x4, scoped, tag = 'scoped memory for sub.7']
  %s0 = inlined_call_operand.vmem [shape: f32[8,8], index: 0, kind: input, shape index: {}]
  %s1 = inlined_call_operand.vmem [shape: f32[8,8], index: 1, kind: input, shape index: {}]
  %s2 = inlined_call_operand.vmem [shape: f32[8,8], index: 2, kind: output, shape index: {}]
  %v3 = vld [vmem:[%s0] sm:$0xff]
  %v4 = vld [vmem:[%s1] sm:$0xff]
  %5 = xla_tuple %v3, %v4
  %6 = xla_tuple %5
  %v7 = vsub.f32 %v3, %v4
  %8 = xla_tuple %v7
  %9 = vst [vmem:[%s2] sm:$0xff] %v7

// kernel: sir_forward.1
$region0: #{sir_forward.1}
  #allocation0 [shape = 'u32[]', space=smem, size = 0x4, offset = 0x4, fixed_abs, tag = 'smem constant byte address 0x4 - core index']
  #allocation1 [shape = 'u32[144,128]{1,0:T(1,128)}', space=vmem, size = 0x12000, scoped, tag = 'internal scratch']
  %s0 = inlined_call_operand.vmem [shape: bf16[128,128], index: 0, kind: input, shape index: {}]
  %s1 = inlined_call_operand.vmem [shape: f32[8,128], index: 1, kind: input, shape index: {}]
  %s2 = inlined_call_operand.vmem [shape: f32[8,8,128], index: 2, kind: input, shape index: {}]
  %s3 = inlined_call_operand.vmem [shape: f32[8,8,128], index: 3, kind: input, shape index: {}]
  %s4 = inlined_call_operand.vmem [shape: f32[17,8,128], index: 4, kind: output, shape index: {}]
  %s5 = sld [smem:[#allocation0]]
  $region26: #{sir_forward.1} parent=0
    _
  %s7 = ssub.s32 1, %s5
  %s8 = scalar_select 0, %s7, %s5
  // Predicated region
  $region2: #{sir_forward.1} parent=0 // pred_check
    _
  $region3: #{sir_forward.1} parent=0 // pred_check_branch
    %10 = sbr.rel (0) target = $region5
  $region4: #{sir_forward.1} parent=0 // pred_region
    _
  $region5: #{sir_forward.1} parent=0 // pred_fallthru
    _
  // Predicated region
  $region6: #{sir_forward.1} parent=0 // pred_check
    _
  $region7: #{sir_forward.1} parent=0 // pred_check_branch
    %12 = sbr.rel (0) target = $region9
  $region8: #{sir_forward.1} parent=0 // pred_region
    _
  $region9: #{sir_forward.1} parent=0 // pred_fallthru
    _
  // Predicated region
  $region10: #{sir_forward.1} parent=0 // pred_check
    _
  $region11: #{sir_forward.1} parent=0 // pred_check_branch
    %14 = sbr.rel (0) target = $region13
  $region12: #{sir_forward.1} parent=0 // pred_region
    _
  $region13: #{sir_forward.1} parent=0 // pred_fallthru
    _
  // Predicated region
  $region14: #{sir_forward.1} parent=0 // pred_check
    _
  $region15: #{sir_forward.1} parent=0 // pred_check_branch
    %16 = sbr.rel (0) target = $region17
  $region16: #{sir_forward.1} parent=0 // pred_region
    _
  $region17: #{sir_forward.1} parent=0 // pred_fallthru
    _
  %v18 = vld [vmem:[%s0] sm:$0xf]
  %v19 = vld [vmem:[%s0 + $0x4] sm:$0xf]
  %v20 = vld [vmem:[%s0 + $0x8] sm:$0xf]
  %v21 = vld [vmem:[%s0 + $0xc] sm:$0xf]
  %v22 = vld [vmem:[%s0 + $0x10] sm:$0xf]
  %v23 = vld [vmem:[%s0 + $0x14] sm:$0xf]
  %v24 = vld [vmem:[%s0 + $0x18] sm:$0xf]
  %v25 = vld [vmem:[%s0 + $0x1c] sm:$0xf]
  %v26 = vld [vmem:[%s0 + $0x20] sm:$0xf]
  %v27 = vld [vmem:[%s0 + $0x24] sm:$0xf]
  %v28 = vld [vmem:[%s0 + $0x28] sm:$0xf]
  %v29 = vld [vmem:[%s0 + $0x2c] sm:$0xf]
  %v30 = vld [vmem:[%s0 + $0x30] sm:$0xf]
  %v31 = vld [vmem:[%s0 + $0x34] sm:$0xf]
  %v32 = vld [vmem:[%s0 + $0x38] sm:$0xf]
  %v33 = vld [vmem:[%s0 + $0x3c] sm:$0xf]
  %v34 = vld [vmem:[%s1] sm:$0xff]
  %v35 = vsub.f32 1.0, %v34
  %36 = vst [vmem:[%s4] sm:$0xff] %v34
  %v37 = vpack.c.bf16 %v34, %v34
  %v54 = vunpack.c.l.b16 %v18
  %v55 = vunpack.c.l.b16 %v19
  %v56 = vunpack.c.l.b16 %v20
  %v57 = vunpack.c.l.b16 %v21
  %v58 = vunpack.c.l.b16 %v22
  %v59 = vunpack.c.l.b16 %v23
  %v60 = vunpack.c.l.b16 %v24
  %v61 = vunpack.c.l.b16 %v25
  %v62 = vunpack.c.l.b16 %v26
  %v63 = vunpack.c.l.b16 %v27
  %v64 = vunpack.c.l.b16 %v28
  %v65 = vunpack.c.l.b16 %v29
  %v66 = vunpack.c.l.b16 %v30
  %v67 = vunpack.c.l.b16 %v31
  %v68 = vunpack.c.l.b16 %v32
  %v69 = vunpack.c.l.b16 %v33
  %v70 = vpack.c.b16 %v55, %v54
  %v71 = vpack.c.b16 %v57, %v56
  %v72 = vpack.c.b16 %v59, %v58
  %v73 = vpack.c.b16 %v61, %v60
  %v74 = vpack.c.b16 %v63, %v62
  %v75 = vpack.c.b16 %v65, %v64
  %v76 = vpack.c.b16 %v67, %v66
  %v77 = vpack.c.b16 %v69, %v68
  %86 = vmatprep.subr.bf16.mxu0 0
  %87 = vmatpush1.bf16.msra.mxu0 %v77
  %88 = vmatprep.subr.bf16.mxu0 0
  %89 = vmatpush1.bf16.msra.mxu0 %v76
  %90 = vmatprep.subr.bf16.mxu0 0
  %91 = vmatpush1.bf16.msra.mxu0 %v75
  %92 = vmatprep.subr.bf16.mxu0 0
  %93 = vmatpush1.bf16.msra.mxu0 %v74
  %94 = vmatprep.subr.bf16.mxu0 0
  %95 = vmatpush1.bf16.msra.mxu0 %v73
  %96 = vmatprep.subr.bf16.mxu0 0
  %97 = vmatpush1.bf16.msra.mxu0 %v72
  %98 = vmatprep.subr.bf16.mxu0 0
  %99 = vmatpush1.bf16.msra.mxu0 %v71
  %100 = vmatprep.subr.bf16.mxu0 0
  %101 = vmatpush1.bf16.msra.mxu0 %v70
  %102 = vmatprep.subr.bf16.mxu0 0
  %103 = vmatpush2.bf16.msra.mxu0 0
  %104 = vmatprep.subr.bf16.mxu0 0
  %105 = vmatpush2.bf16.msra.mxu0 0
  %106 = vmatprep.subr.bf16.mxu0 0
  %107 = vmatpush2.bf16.msra.mxu0 0
  %108 = vmatprep.subr.bf16.mxu0 0
  %109 = vmatpush2.bf16.msra.mxu0 0
  %110 = vmatprep.subr.bf16.mxu0 0
  %111 = vmatpush2.bf16.msra.mxu0 0
  %112 = vmatprep.subr.bf16.mxu0 0
  %113 = vmatpush2.bf16.msra.mxu0 0
  %114 = vmatprep.subr.bf16.mxu0 0
  %115 = vmatpush2.bf16.msra.mxu0 0
  %116 = vmatprep.subr.bf16.mxu0 0
  %117 = vmatpush2.bf16.msra.mxu0 0
  %118 = vmatprep.mubr.bf16.mxu0 0
  %119 = vmatmul.mubr.bf16.gmra.mxu0 %v37
  %v120 = vpop.f32.mrf.mxu0
  %v121 = vadd.f32 0.0, %v120
  %v122 = vpop.f32.mrf.mxu0
  %v123 = vpop.f32.mrf.mxu0
  %v124 = vpop.f32.mrf.mxu0
  %125 = vdwg.mxu0
  %v126 = vld [vmem:[%s2] sm:$0xff]
  %vm127 = vcmp.ge.f32.partialorder %v121, %v126
  %v128 = vsel %vm127, %v35, 0.0
  %v129 = vld [vmem:[%s3] sm:$0xff]
  %v130 = vmul.f32 %v34, %v129
  %s131 = scalar_lea.vmem %s4, 8
  %132 = vst [vmem:[%s131] sm:$0xff] %v128
  %s133 = scalar_lea.vmem %s4, 16
  %134 = vst [vmem:[%s133] sm:$0xff] %v130
  %v135 = vadd.f32 %v34, %v128
  %v136 = vsub.f32 %v135, %v130
  %v137 = vsub.f32 %v35, %v128
  %v138 = vpack.c.bf16 %v136, %v136
  %139 = vmatprep.subr.bf16.mxu0 0
  %140 = vmatpush1.bf16.msra.mxu0 %v77
  %141 = vmatprep.subr.bf16.mxu0 0
  %142 = vmatpush1.bf16.msra.mxu0 %v76
  %143 = vmatprep.subr.bf16.mxu0 0
  %144 = vmatpush1.bf16.msra.mxu0 %v75
  %145 = vmatprep.subr.bf16.mxu0 0
  %146 = vmatpush1.bf16.msra.mxu0 %v74
  %147 = vmatprep.subr.bf16.mxu0 0
  %148 = vmatpush1.bf16.msra.mxu0 %v73
  %149 = vmatprep.subr.bf16.mxu0 0
  %150 = vmatpush1.bf16.msra.mxu0 %v72
  %151 = vmatprep.subr.bf16.mxu0 0
  %152 = vmatpush1.bf16.msra.mxu0 %v71
  %153 = vmatprep.subr.bf16.mxu0 0
  %154 = vmatpush1.bf16.msra.mxu0 %v70
  %155 = vmatprep.subr.bf16.mxu0 0
  %156 = vmatpush2.bf16.msra.mxu0 0
  %157 = vmatprep.subr.bf16.mxu0 0
  %158 = vmatpush2.bf16.msra.mxu0 0
  %159 = vmatprep.subr.bf16.mxu0 0
  %160 = vmatpush2.bf16.msra.mxu0 0
  %161 = vmatprep.subr.bf16.mxu0 0
  %162 = vmatpush2.bf16.msra.mxu0 0
  %163 = vmatprep.subr.bf16.mxu0 0
  %164 = vmatpush2.bf16.msra.mxu0 0
  %165 = vmatprep.subr.bf16.mxu0 0
  %166 = vmatpush2.bf16.msra.mxu0 0
  %167 = vmatprep.subr.bf16.mxu0 0
  %168 = vmatpush2.bf16.msra.mxu0 0
  %169 = vmatprep.subr.bf16.mxu0 0
  %170 = vmatpush2.bf16.msra.mxu0 0
  %171 = vmatprep.mubr.bf16.mxu0 0
  %172 = vmatmul.mubr.bf16.gmra.mxu0 %v138
  %v173 = vpop.f32.mrf.mxu0
  %v174 = vadd.f32 0.0, %v173
  %v175 = vpop.f32.mrf.mxu0
  %v176 = vpop.f32.mrf.mxu0
  %v177 = vpop.f32.mrf.mxu0
  %178 = vdwg.mxu0
  %s179 = scalar_lea.vmem %s2, 8
  %v180 = vld [vmem:[%s179] sm:$0xff]
  %vm181 = vcmp.ge.f32.partialorder %v174, %v180
  %v182 = vsel %vm181, %v137, 0.0
  %s183 = scalar_lea.vmem %s3, 8
  %v184 = vld [vmem:[%s183] sm:$0xff]
  %v185 = vmul.f32 %v136, %v184
  %s186 = scalar_lea.vmem %s4, 24
  %187 = vst [vmem:[%s186] sm:$0xff] %v182
  %s188 = scalar_lea.vmem %s4, 32
  %189 = vst [vmem:[%s188] sm:$0xff] %v185
  %v190 = vadd.f32 %v136, %v182
  %v191 = vsub.f32 %v190, %v185
  %v192 = vsub.f32 %v137, %v182
  %v193 = vpack.c.bf16 %v191, %v191
  %194 = vmatprep.subr.bf16.mxu0 0
  %195 = vmatpush1.bf16.msra.mxu0 %v77
  %196 = vmatprep.subr.bf16.mxu0 0
  %197 = vmatpush1.bf16.msra.mxu0 %v76
  %198 = vmatprep.subr.bf16.mxu0 0
  %199 = vmatpush1.bf16.msra.mxu0 %v75
  %200 = vmatprep.subr.bf16.mxu0 0
  %201 = vmatpush1.bf16.msra.mxu0 %v74
  %202 = vmatprep.subr.bf16.mxu0 0
  %203 = vmatpush1.bf16.msra.mxu0 %v73
  %204 = vmatprep.subr.bf16.mxu0 0
  %205 = vmatpush1.bf16.msra.mxu0 %v72
  %206 = vmatprep.subr.bf16.mxu0 0
  %207 = vmatpush1.bf16.msra.mxu0 %v71
  %208 = vmatprep.subr.bf16.mxu0 0
  %209 = vmatpush1.bf16.msra.mxu0 %v70
  %210 = vmatprep.subr.bf16.mxu0 0
  %211 = vmatpush2.bf16.msra.mxu0 0
  %212 = vmatprep.subr.bf16.mxu0 0
  %213 = vmatpush2.bf16.msra.mxu0 0
  %214 = vmatprep.subr.bf16.mxu0 0
  %215 = vmatpush2.bf16.msra.mxu0 0
  %216 = vmatprep.subr.bf16.mxu0 0
  %217 = vmatpush2.bf16.msra.mxu0 0
  %218 = vmatprep.subr.bf16.mxu0 0
  %219 = vmatpush2.bf16.msra.mxu0 0
  %220 = vmatprep.subr.bf16.mxu0 0
  %221 = vmatpush2.bf16.msra.mxu0 0
  %222 = vmatprep.subr.bf16.mxu0 0
  %223 = vmatpush2.bf16.msra.mxu0 0
  %224 = vmatprep.subr.bf16.mxu0 0
  %225 = vmatpush2.bf16.msra.mxu0 0
  %226 = vmatprep.mubr.bf16.mxu0 0
  %227 = vmatmul.mubr.bf16.gmra.mxu0 %v193
  %v228 = vpop.f32.mrf.mxu0
  %v229 = vadd.f32 0.0, %v228
  %v230 = vpop.f32.mrf.mxu0
  %v231 = vpop.f32.mrf.mxu0
  %v232 = vpop.f32.mrf.mxu0
  %233 = vdwg.mxu0
  %s234 = scalar_lea.vmem %s2, 16
  %v235 = vld [vmem:[%s234] sm:$0xff]
  %vm236 = vcmp.ge.f32.partialorder %v229, %v235
  %v237 = vsel %vm236, %v192, 0.0
  %s238 = scalar_lea.vmem %s3, 16
  %v239 = vld [vmem:[%s238] sm:$0xff]
  %v240 = vmul.f32 %v191, %v239
  %s241 = scalar_lea.vmem %s4, 40
  %242 = vst [vmem:[%s241] sm:$0xff] %v237
  %s243 = scalar_lea.vmem %s4, 48
  %244 = vst [vmem:[%s243] sm:$0xff] %v240
  %v245 = vadd.f32 %v191, %v237
  %v246 = vsub.f32 %v245, %v240
  %v247 = vsub.f32 %v192, %v237
  %v248 = vpack.c.bf16 %v246, %v246
  %249 = vmatprep.subr.bf16.mxu0 0
  %250 = vmatpush1.bf16.msra.mxu0 %v77
  %251 = vmatprep.subr.bf16.mxu0 0
  %252 = vmatpush1.bf16.msra.mxu0 %v76
  %253 = vmatprep.subr.bf16.mxu0 0
  %254 = vmatpush1.bf16.msra.mxu0 %v75
  %255 = vmatprep.subr.bf16.mxu0 0
  %256 = vmatpush1.bf16.msra.mxu0 %v74
  %257 = vmatprep.subr.bf16.mxu0 0
  %258 = vmatpush1.bf16.msra.mxu0 %v73
  %259 = vmatprep.subr.bf16.mxu0 0
  %260 = vmatpush1.bf16.msra.mxu0 %v72
  %261 = vmatprep.subr.bf16.mxu0 0
  %262 = vmatpush1.bf16.msra.mxu0 %v71
  %263 = vmatprep.subr.bf16.mxu0 0
  %264 = vmatpush1.bf16.msra.mxu0 %v70
  %265 = vmatprep.subr.bf16.mxu0 0
  %266 = vmatpush2.bf16.msra.mxu0 0
  %267 = vmatprep.subr.bf16.mxu0 0
  %268 = vmatpush2.bf16.msra.mxu0 0
  %269 = vmatprep.subr.bf16.mxu0 0
  %270 = vmatpush2.bf16.msra.mxu0 0
  %271 = vmatprep.subr.bf16.mxu0 0
  %272 = vmatpush2.bf16.msra.mxu0 0
  %273 = vmatprep.subr.bf16.mxu0 0
  %274 = vmatpush2.bf16.msra.mxu0 0
  %275 = vmatprep.subr.bf16.mxu0 0
  %276 = vmatpush2.bf16.msra.mxu0 0
  %277 = vmatprep.subr.bf16.mxu0 0
  %278 = vmatpush2.bf16.msra.mxu0 0
  %279 = vmatprep.subr.bf16.mxu0 0
  %280 = vmatpush2.bf16.msra.mxu0 0
  %281 = vmatprep.mubr.bf16.mxu0 0
  %282 = vmatmul.mubr.bf16.gmra.mxu0 %v248
  %v283 = vpop.f32.mrf.mxu0
  %v284 = vadd.f32 0.0, %v283
  %v285 = vpop.f32.mrf.mxu0
  %v286 = vpop.f32.mrf.mxu0
  %v287 = vpop.f32.mrf.mxu0
  %288 = vdwg.mxu0
  %s289 = scalar_lea.vmem %s2, 24
  %v290 = vld [vmem:[%s289] sm:$0xff]
  %vm291 = vcmp.ge.f32.partialorder %v284, %v290
  %v292 = vsel %vm291, %v247, 0.0
  %s293 = scalar_lea.vmem %s3, 24
  %v294 = vld [vmem:[%s293] sm:$0xff]
  %v295 = vmul.f32 %v246, %v294
  %s296 = scalar_lea.vmem %s4, 56
  %297 = vst [vmem:[%s296] sm:$0xff] %v292
  %s298 = scalar_lea.vmem %s4, 64
  %299 = vst [vmem:[%s298] sm:$0xff] %v295
  %v300 = vadd.f32 %v246, %v292
  %v301 = vsub.f32 %v300, %v295
  %v302 = vsub.f32 %v247, %v292
  %v303 = vpack.c.bf16 %v301, %v301
  %304 = vmatprep.subr.bf16.mxu0 0
  %305 = vmatpush1.bf16.msra.mxu0 %v77
  %306 = vmatprep.subr.bf16.mxu0 0
  %307 = vmatpush1.bf16.msra.mxu0 %v76
  %308 = vmatprep.subr.bf16.mxu0 0
  %309 = vmatpush1.bf16.msra.mxu0 %v75
  %310 = vmatprep.subr.bf16.mxu0 0
  %311 = vmatpush1.bf16.msra.mxu0 %v74
  %312 = vmatprep.subr.bf16.mxu0 0
  %313 = vmatpush1.bf16.msra.mxu0 %v73
  %314 = vmatprep.subr.bf16.mxu0 0
  %315 = vmatpush1.bf16.msra.mxu0 %v72
  %316 = vmatprep.subr.bf16.mxu0 0
  %317 = vmatpush1.bf16.msra.mxu0 %v71
  %318 = vmatprep.subr.bf16.mxu0 0
  %319 = vmatpush1.bf16.msra.mxu0 %v70
  %320 = vmatprep.subr.bf16.mxu0 0
  %321 = vmatpush2.bf16.msra.mxu0 0
  %322 = vmatprep.subr.bf16.mxu0 0
  %323 = vmatpush2.bf16.msra.mxu0 0
  %324 = vmatprep.subr.bf16.mxu0 0
  %325 = vmatpush2.bf16.msra.mxu0 0
  %326 = vmatprep.subr.bf16.mxu0 0
  %327 = vmatpush2.bf16.msra.mxu0 0
  %328 = vmatprep.subr.bf16.mxu0 0
  %329 = vmatpush2.bf16.msra.mxu0 0
  %330 = vmatprep.subr.bf16.mxu0 0
  %331 = vmatpush2.bf16.msra.mxu0 0
  %332 = vmatprep.subr.bf16.mxu0 0
  %333 = vmatpush2.bf16.msra.mxu0 0
  %334 = vmatprep.subr.bf16.mxu0 0
  %335 = vmatpush2.bf16.msra.mxu0 0
  %336 = vmatprep.mubr.bf16.mxu0 0
  %337 = vmatmul.mubr.bf16.gmra.mxu0 %v303
  %v338 = vpop.f32.mrf.mxu0
  %v339 = vadd.f32 0.0, %v338
  %v340 = vpop.f32.mrf.mxu0
  %v341 = vpop.f32.mrf.mxu0
  %v342 = vpop.f32.mrf.mxu0
  %343 = vdwg.mxu0
  %s344 = scalar_lea.vmem %s2, 32
  %v345 = vld [vmem:[%s344] sm:$0xff]
  %vm346 = vcmp.ge.f32.partialorder %v339, %v345
  %v347 = vsel %vm346, %v302, 0.0
  %s348 = scalar_lea.vmem %s3, 32
  %v349 = vld [vmem:[%s348] sm:$0xff]
  %v350 = vmul.f32 %v301, %v349
  %s351 = scalar_lea.vmem %s4, 72
  %352 = vst [vmem:[%s351] sm:$0xff] %v347
  %s353 = scalar_lea.vmem %s4, 80
  %354 = vst [vmem:[%s353] sm:$0xff] %v350
  %v355 = vadd.f32 %v301, %v347
  %v356 = vsub.f32 %v355, %v350
  %v357 = vsub.f32 %v302, %v347
  %v358 = vpack.c.bf16 %v356, %v356
  %359 = vmatprep.subr.bf16.mxu0 0
  %360 = vmatpush1.bf16.msra.mxu0 %v77
  %361 = vmatprep.subr.bf16.mxu0 0
  %362 = vmatpush1.bf16.msra.mxu0 %v76
  %363 = vmatprep.subr.bf16.mxu0 0
  %364 = vmatpush1.bf16.msra.mxu0 %v75
  %365 = vmatprep.subr.bf16.mxu0 0
  %366 = vmatpush1.bf16.msra.mxu0 %v74
  %367 = vmatprep.subr.bf16.mxu0 0
  %368 = vmatpush1.bf16.msra.mxu0 %v73
  %369 = vmatprep.subr.bf16.mxu0 0
  %370 = vmatpush1.bf16.msra.mxu0 %v72
  %371 = vmatprep.subr.bf16.mxu0 0
  %372 = vmatpush1.bf16.msra.mxu0 %v71
  %373 = vmatprep.subr.bf16.mxu0 0
  %374 = vmatpush1.bf16.msra.mxu0 %v70
  %375 = vmatprep.subr.bf16.mxu0 0
  %376 = vmatpush2.bf16.msra.mxu0 0
  %377 = vmatprep.subr.bf16.mxu0 0
  %378 = vmatpush2.bf16.msra.mxu0 0
  %379 = vmatprep.subr.bf16.mxu0 0
  %380 = vmatpush2.bf16.msra.mxu0 0
  %381 = vmatprep.subr.bf16.mxu0 0
  %382 = vmatpush2.bf16.msra.mxu0 0
  %383 = vmatprep.subr.bf16.mxu0 0
  %384 = vmatpush2.bf16.msra.mxu0 0
  %385 = vmatprep.subr.bf16.mxu0 0
  %386 = vmatpush2.bf16.msra.mxu0 0
  %387 = vmatprep.subr.bf16.mxu0 0
  %388 = vmatpush2.bf16.msra.mxu0 0
  %389 = vmatprep.subr.bf16.mxu0 0
  %390 = vmatpush2.bf16.msra.mxu0 0
  %391 = vmatprep.mubr.bf16.mxu0 0
  %392 = vmatmul.mubr.bf16.gmra.mxu0 %v358
  %v393 = vpop.f32.mrf.mxu0
  %v394 = vadd.f32 0.0, %v393
  %v395 = vpop.f32.mrf.mxu0
  %v396 = vpop.f32.mrf.mxu0
  %v397 = vpop.f32.mrf.mxu0
  %398 = vdwg.mxu0
  %s399 = scalar_lea.vmem %s2, 40
  %v400 = vld [vmem:[%s399] sm:$0xff]
  %vm401 = vcmp.ge.f32.partialorder %v394, %v400
  %v402 = vsel %vm401, %v357, 0.0
  %s403 = scalar_lea.vmem %s3, 40
  %v404 = vld [vmem:[%s403] sm:$0xff]
  %v405 = vmul.f32 %v356, %v404
  %s406 = scalar_lea.vmem %s4, 88
  %407 = vst [vmem:[%s406] sm:$0xff] %v402
  %s408 = scalar_lea.vmem %s4, 96
  %409 = vst [vmem:[%s408] sm:$0xff] %v405
  %v410 = vadd.f32 %v356, %v402
  %v411 = vsub.f32 %v410, %v405
  %v412 = vsub.f32 %v357, %v402
  %v413 = vpack.c.bf16 %v411, %v411
  %414 = vmatprep.subr.bf16.mxu0 0
  %415 = vmatpush1.bf16.msra.mxu0 %v77
  %416 = vmatprep.subr.bf16.mxu0 0
  %417 = vmatpush1.bf16.msra.mxu0 %v76
  %418 = vmatprep.subr.bf16.mxu0 0
  %419 = vmatpush1.bf16.msra.mxu0 %v75
  %420 = vmatprep.subr.bf16.mxu0 0
  %421 = vmatpush1.bf16.msra.mxu0 %v74
  %422 = vmatprep.subr.bf16.mxu0 0
  %423 = vmatpush1.bf16.msra.mxu0 %v73
  %424 = vmatprep.subr.bf16.mxu0 0
  %425 = vmatpush1.bf16.msra.mxu0 %v72
  %426 = vmatprep.subr.bf16.mxu0 0
  %427 = vmatpush1.bf16.msra.mxu0 %v71
  %428 = vmatprep.subr.bf16.mxu0 0
  %429 = vmatpush1.bf16.msra.mxu0 %v70
  %430 = vmatprep.subr.bf16.mxu0 0
  %431 = vmatpush2.bf16.msra.mxu0 0
  %432 = vmatprep.subr.bf16.mxu0 0
  %433 = vmatpush2.bf16.msra.mxu0 0
  %434 = vmatprep.subr.bf16.mxu0 0
  %435 = vmatpush2.bf16.msra.mxu0 0
  %436 = vmatprep.subr.bf16.mxu0 0
  %437 = vmatpush2.bf16.msra.mxu0 0
  %438 = vmatprep.subr.bf16.mxu0 0
  %439 = vmatpush2.bf16.msra.mxu0 0
  %440 = vmatprep.subr.bf16.mxu0 0
  %441 = vmatpush2.bf16.msra.mxu0 0
  %442 = vmatprep.subr.bf16.mxu0 0
  %443 = vmatpush2.bf16.msra.mxu0 0
  %444 = vmatprep.subr.bf16.mxu0 0
  %445 = vmatpush2.bf16.msra.mxu0 0
  %446 = vmatprep.mubr.bf16.mxu0 0
  %447 = vmatmul.mubr.bf16.gmra.mxu0 %v413
  %v448 = vpop.f32.mrf.mxu0
  %v449 = vadd.f32 0.0, %v448
  %v450 = vpop.f32.mrf.mxu0
  %v451 = vpop.f32.mrf.mxu0
  %v452 = vpop.f32.mrf.mxu0
  %453 = vdwg.mxu0
  %s454 = scalar_lea.vmem %s2, 48
  %v455 = vld [vmem:[%s454] sm:$0xff]
  %vm456 = vcmp.ge.f32.partialorder %v449, %v455
  %v457 = vsel %vm456, %v412, 0.0
  %s458 = scalar_lea.vmem %s3, 48
  %v459 = vld [vmem:[%s458] sm:$0xff]
  %v460 = vmul.f32 %v411, %v459
  %s461 = scalar_lea.vmem %s4, 104
  %462 = vst [vmem:[%s461] sm:$0xff] %v457
  %s463 = scalar_lea.vmem %s4, 112
  %464 = vst [vmem:[%s463] sm:$0xff] %v460
  %v465 = vadd.f32 %v411, %v457
  %v466 = vsub.f32 %v465, %v460
  %v467 = vsub.f32 %v412, %v457
  %v468 = vpack.c.bf16 %v466, %v466
  %469 = vmatprep.subr.bf16.mxu0 0
  %470 = vmatpush1.bf16.msra.mxu0 %v77
  %471 = vmatprep.subr.bf16.mxu0 0
  %472 = vmatpush1.bf16.msra.mxu0 %v76
  %473 = vmatprep.subr.bf16.mxu0 0
  %474 = vmatpush1.bf16.msra.mxu0 %v75
  %475 = vmatprep.subr.bf16.mxu0 0
  %476 = vmatpush1.bf16.msra.mxu0 %v74
  %477 = vmatprep.subr.bf16.mxu0 0
  %478 = vmatpush1.bf16.msra.mxu0 %v73
  %479 = vmatprep.subr.bf16.mxu0 0
  %480 = vmatpush1.bf16.msra.mxu0 %v72
  %481 = vmatprep.subr.bf16.mxu0 0
  %482 = vmatpush1.bf16.msra.mxu0 %v71
  %483 = vmatprep.subr.bf16.mxu0 0
  %484 = vmatpush1.bf16.msra.mxu0 %v70
  %485 = vmatprep.subr.bf16.mxu0 0
  %486 = vmatpush2.bf16.msra.mxu0 0
  %487 = vmatprep.subr.bf16.mxu0 0
  %488 = vmatpush2.bf16.msra.mxu0 0
  %489 = vmatprep.subr.bf16.mxu0 0
  %490 = vmatpush2.bf16.msra.mxu0 0
  %491 = vmatprep.subr.bf16.mxu0 0
  %492 = vmatpush2.bf16.msra.mxu0 0
  %493 = vmatprep.subr.bf16.mxu0 0
  %494 = vmatpush2.bf16.msra.mxu0 0
  %495 = vmatprep.subr.bf16.mxu0 0
  %496 = vmatpush2.bf16.msra.mxu0 0
  %497 = vmatprep.subr.bf16.mxu0 0
  %498 = vmatpush2.bf16.msra.mxu0 0
  %499 = vmatprep.subr.bf16.mxu0 0
  %500 = vmatpush2.bf16.msra.mxu0 0
  %501 = vmatprep.mubr.bf16.mxu0 0
  %502 = vmatmul.mubr.bf16.gmra.mxu0 %v468
  %v503 = vpop.f32.mrf.mxu0
  %v504 = vadd.f32 0.0, %v503
  %v505 = vpop.f32.mrf.mxu0
  %v506 = vpop.f32.mrf.mxu0
  %v507 = vpop.f32.mrf.mxu0
  %508 = vdwg.mxu0
  %s509 = scalar_lea.vmem %s2, 56
  %v510 = vld [vmem:[%s509] sm:$0xff]
  %vm511 = vcmp.ge.f32.partialorder %v504, %v510
  %v512 = vsel %vm511, %v467, 0.0
  %s513 = scalar_lea.vmem %s3, 56
  %v514 = vld [vmem:[%s513] sm:$0xff]
  %v515 = vmul.f32 %v466, %v514
  %s516 = scalar_lea.vmem %s4, 120
  %517 = vst [vmem:[%s516] sm:$0xff] %v512
  %s518 = scalar_lea.vmem %s4, 128
  %519 = vst [vmem:[%s518] sm:$0xff] %v515
  // Predicated region
  $region18: #{sir_forward.1} parent=0 // pred_check
    _
  $region19: #{sir_forward.1} parent=0 // pred_check_branch
    %521 = sbr.rel (0) target = $region21
  $region20: #{sir_forward.1} parent=0 // pred_region
    _
  $region21: #{sir_forward.1} parent=0 // pred_fallthru
    _
  // Predicated region
  $region22: #{sir_forward.1} parent=0 // pred_check
    _
  $region23: #{sir_forward.1} parent=0 // pred_check_branch
    %523 = sbr.rel (0) target = $region25
  $region24: #{sir_forward.1} parent=0 // pred_region
    _
  $region25: #{sir_forward.1} parent=0 // pred_fallthru
    _

</llo_original>
